<compile_context>
chip_gen: v5e
topology: v5e:2x2
jax: 0.10.0
libtpu: 0.0.40
codegen_flags: <defaults>
</compile_context>

<pallas_src>
import jax
import jax.numpy as jnp
from jax.experimental import pallas as pl
from jax.experimental.pallas import tpu as pltpu

LANES = 128


def _generator_kernel(x_ref, eps_ref, wm_ref, bm_ref, ws_ref, bs_ref,
                      w1a_ref, w1b_ref, w2_ref, out_ref):
    # Per grid step shapes:
    #   x_ref   [bn, 1, C]          eps_ref [bn, R, C]
    #   wm_ref / ws_ref [1, C]      bm_ref / bs_ref [1, 1]  (SMEM scalars)
    #   w1a_ref / w1b_ref [C, C]    w2_ref [C, Cp]
    #   out_ref [bn * R, Cp]
    bn, R, C = eps_ref.shape
    x = x_ref[...].reshape(bn, C)                                   # [bn, C]

    # mean_layer / std_layer: 1-wide projections done on VPU (mul) + XLU (reduce),
    # keeping the MXU free for the real matmuls below.
    mean = jnp.sum(x * wm_ref[...], axis=-1, keepdims=True) + bm_ref[0, 0]   # [bn, 1]
    std = jnp.maximum(
        jnp.sum(x * ws_ref[...], axis=-1, keepdims=True) + bs_ref[0, 0], 0.0)

    # z ~ Normal(mean, std) via reparameterization, broadcast over the R repeats.
    z = mean[:, None, :] + std[:, None, :] * eps_ref[...]           # [bn, R, C]
    z = z.reshape(bn * R, C)

    # mlp layer 1: cat([x_rep, z], -1) @ W1 == x_rep @ W1[:C] + z @ W1[C:].
    # x rows repeat R times, so x @ W1[:C] is computed once per original row
    # and broadcast over the repeats.
    xa = jnp.dot(x, w1a_ref[...], preferred_element_type=jnp.float32)        # [bn, C]
    xa = jnp.broadcast_to(xa[:, None, :], (bn, R, C)).reshape(bn * R, C)
    h = jnp.maximum(
        xa + jnp.dot(z, w1b_ref[...], preferred_element_type=jnp.float32), 0.0)

    # mlp layer 2 (+ReLU). w2 is zero-padded to Cp lanes so the store is
    # lane-dense (unmasked vst); padded columns stay exactly 0.
    out = jnp.maximum(jnp.dot(h, w2_ref[...], preferred_element_type=jnp.float32), 0.0)
    out_ref[...] = out.astype(out_ref.dtype)


def init_params(key, input_size):
    C = input_size
    k = jax.random.split(key, 6)
    lim = 1.0 / jnp.sqrt(jnp.float32(C))
    # mean_layer / std_layer: PyTorch default Linear init, stored as [1, C] rows.
    w_mean = jax.random.uniform(k[0], (1, C), jnp.float32, -lim, lim)
    b_mean = jax.random.uniform(k[1], (1, 1), jnp.float32, -lim, lim)
    w_std = jax.random.uniform(k[2], (1, C), jnp.float32, -lim, lim)
    b_std = jax.random.uniform(k[3], (1, 1), jnp.float32, -lim, lim)
    # mlp weights: eye + N(0, 0.02), stored transposed so forward is x @ W.
    w1 = jnp.eye(2 * C, C, dtype=jnp.float32) + 0.02 * jax.random.normal(
        k[4], (2 * C, C), jnp.float32)
    w1a, w1b = w1[:C], w1[C:]
    w2 = jnp.eye(C, dtype=jnp.float32) + 0.02 * jax.random.normal(
        k[5], (C, C), jnp.float32)
    return (w_mean, b_mean, w_std, b_std, w1a, w1b, w2)


def generator_forward(params, x, label, eps, repeat_time=16, block_n=None):
    """x: [N, C] f32, label: [N] int32, eps: [N, repeat_time, C] std-normal noise."""
    N, C = x.shape
    R = repeat_time
    M = N * R

    if block_n is None:
        # Big row tiles (amortize per-step overhead) but keep >= 2 parallel grid
        # steps when N allows, so both TensorCores on v7x get work.
        block_n = max(1, min(max(N // 2, 1), max(1, 512 // R)))
    assert N % block_n == 0
    assert (block_n * R) % 8 == 0 or block_n == N, "row tile should be a multiple of 8"
    grid = (N // block_n,)

    # Lane-pad the output feature dim to a multiple of 128 -> unmasked stores.
    Cp = ((C + LANES - 1) // LANES) * LANES

    w_mean, b_mean, w_std, b_std, w1a, w1b, w2 = params
    w2p = jnp.pad(w2, ((0, 0), (0, Cp - C))) if Cp != C else w2

    x3 = x[:, None, :]                            # [N, 1, C]  (free view)
    label_rep = jnp.repeat(label, R, axis=0)      # [M]  (pure data movement, outside kernel)

    # VMEM budget: double-buffered x/eps/out blocks + weights, with headroom.
    blk_bytes = 4 * (block_n * C + block_n * R * C + block_n * R * Cp)
    w_bytes = 4 * (4 * C + 2 * C * C + C * Cp + 2)
    vmem_limit = int(min(64 << 20, max(16 << 20, 4 * blk_bytes + 2 * w_bytes + (1 << 20))))

    flops = 2 * N * C * C + 2 * M * C * C + 2 * M * C * Cp + 8 * M * C
    bytes_accessed = 4 * (N * C + N * R * C + M * Cp + 2 * C * C + C * Cp + 4 * C + 2)

    out_padded = pl.pallas_call(
        _generator_kernel,
        out_shape=jax.ShapeDtypeStruct((M, Cp), x.dtype),
        grid=grid,
        in_specs=[
            pl.BlockSpec((block_n, 1, C), lambda i: (i, 0, 0)),    # x  (repeat done in-kernel)
            pl.BlockSpec((block_n, R, C), lambda i: (i, 0, 0)),    # eps
            pl.BlockSpec((1, C), lambda i: (0, 0)),                # w_mean
            pl.BlockSpec(memory_space=pltpu.MemorySpace.SMEM),     # b_mean (scalar)
            pl.BlockSpec((1, C), lambda i: (0, 0)),                # w_std
            pl.BlockSpec(memory_space=pltpu.MemorySpace.SMEM),     # b_std (scalar)
            pl.BlockSpec((C, C), lambda i: (0, 0)),                # w1a (x half of mlp W1)
            pl.BlockSpec((C, C), lambda i: (0, 0)),                # w1b (z half of mlp W1)
            pl.BlockSpec((C, Cp), lambda i: (0, 0)),               # w2 (lane-padded)
        ],
        out_specs=pl.BlockSpec((block_n * R, Cp), lambda i: (i, 0)),
        compiler_params=pltpu.CompilerParams(
            dimension_semantics=("parallel",),
            vmem_limit_bytes=vmem_limit),
        cost_estimate=pl.CostEstimate(
            flops=flops, transcendentals=0, bytes_accessed=bytes_accessed),
    )(x3, eps, w_mean, b_mean, w_std, b_std, w1a, w1b, w2p)

    out = out_padded[:, :C] if Cp != C else out_padded
    return out, label_rep


def _reference(params, x, label, eps, R):
    """Pure-JAX reference of the same forward pass (for correctness check)."""
    w_mean, b_mean, w_std, b_std, w1a, w1b, w2 = params
    N, C = x.shape
    mean = jnp.sum(x * w_mean, axis=-1, keepdims=True) + b_mean[0, 0]
    std = jnp.maximum(jnp.sum(x * w_std, axis=-1, keepdims=True) + b_std[0, 0], 0.0)
    z = (mean[:, None, :] + std[:, None, :] * eps).reshape(N * R, C)
    xr = jnp.repeat(x, R, axis=0)
    h = jnp.maximum(jnp.dot(xr, w1a) + jnp.dot(z, w1b), 0.0)
    out = jnp.maximum(jnp.dot(h, w2), 0.0)
    return out, jnp.repeat(label, R, axis=0)


if __name__ == "__main__":
    N, C, R = 2, 32, 16   # batch, input_size, repeat_time

    key = jax.random.PRNGKey(0)
    k_params, k_x, k_eps = jax.random.split(key, 3)

    params = init_params(k_params, C)
    x = jax.random.normal(k_x, (N, C), jnp.float32)
    label = jnp.arange(N, dtype=jnp.int32)
    # torch.normal(mean, std) draws i.i.d. per element of the broadcast [N,R,C]
    # shape; reproduced with pre-drawn standard-normal noise (reparam trick).
    eps = jax.random.normal(k_eps, (N, R, C), jnp.float32)

    out, label_out = generator_forward(params, x, label, eps, repeat_time=R)
    jax.block_until_ready(out)
    jax.block_until_ready(label_out)

    assert out.shape == (N * R, C)
    assert label_out.shape == (N * R,)

    ref_out, ref_label = _reference(params, x, label, eps, R)
    assert jnp.allclose(out, ref_out, atol=1e-2, rtol=1e-2)
    assert bool(jnp.all(label_out == ref_label))

    print("KERNEL_OK")
</pallas_src>

<mosaic_0001>
module attributes {stable_mosaic.version = 11 : i64} {
  func.func @_generator_kernel(%arg0: i32, %arg1: memref<1x1x32xf32, #tpu.memory_space<vmem>>, %arg2: memref<1x16x32xf32, #tpu.memory_space<vmem>>, %arg3: memref<1x32xf32, #tpu.memory_space<vmem>>, %arg4: memref<1x1xf32, #tpu.memory_space<smem>>, %arg5: memref<1x32xf32, #tpu.memory_space<vmem>>, %arg6: memref<1x1xf32, #tpu.memory_space<smem>>, %arg7: memref<32x32xf32, #tpu.memory_space<vmem>>, %arg8: memref<32x32xf32, #tpu.memory_space<vmem>>, %arg9: memref<32x128xf32, #tpu.memory_space<vmem>>, %arg10: memref<16x128xf32, #tpu.memory_space<vmem>>) attributes {dimension_semantics = [#tpu.dimension_semantics<parallel>], iteration_bounds = array<i64: 2>, scalar_prefetch = 0 : i64, scratch_operands = 0 : i64, tpu.core_type = #tpu.core_type<tc>, window_params = [{transform_indices = @transform_0, window_bounds = array<i64: 1, 1, 32>}, {transform_indices = @transform_1, window_bounds = array<i64: 1, 16, 32>}, {pipeline_mode = #tpu.pipeline_mode<synchronous>, transform_indices = @transform_2, window_bounds = array<i64: 1, 32>}, {transform_indices = @transform_3, window_bounds = array<i64: 1, 1>}, {pipeline_mode = #tpu.pipeline_mode<synchronous>, transform_indices = @transform_4, window_bounds = array<i64: 1, 32>}, {transform_indices = @transform_5, window_bounds = array<i64: 1, 1>}, {pipeline_mode = #tpu.pipeline_mode<synchronous>, transform_indices = @transform_6, window_bounds = array<i64: 32, 32>}, {pipeline_mode = #tpu.pipeline_mode<synchronous>, transform_indices = @transform_7, window_bounds = array<i64: 32, 32>}, {pipeline_mode = #tpu.pipeline_mode<synchronous>, transform_indices = @transform_8, window_bounds = array<i64: 32, 128>}, {transform_indices = @transform_9, window_bounds = array<i64: 16, 128>}]} {
    %c0 = arith.constant 0 : index
    %c0_0 = arith.constant 0 : index
    %c0_1 = arith.constant 0 : index
    %0 = vector.load %arg1[%c0, %c0_0, %c0_1] : memref<1x1x32xf32, #tpu.memory_space<vmem>>, vector<1x1x32xf32>
    %1 = vector.shape_cast %0 : vector<1x1x32xf32> to vector<1x32xf32>
    %c0_2 = arith.constant 0 : index
    %c0_3 = arith.constant 0 : index
    %2 = vector.load %arg3[%c0_2, %c0_3] : memref<1x32xf32, #tpu.memory_space<vmem>>, vector<1x32xf32>
    %3 = arith.mulf %1, %2 : vector<1x32xf32>
    %cst = arith.constant dense<0.000000e+00> : vector<1xf32>
    %4 = vector.multi_reduction <add>, %3, %cst [1] : vector<1x32xf32> to vector<1xf32>
    %5 = vector.shape_cast %4 : vector<1xf32> to vector<1x1xf32>
    %c0_4 = arith.constant 0 : index
    %c0_5 = arith.constant 0 : index
    %6 = memref.load %arg4[%c0_4, %c0_5] : memref<1x1xf32, #tpu.memory_space<smem>>
    %7 = vector.broadcast %6 : f32 to vector<1x1xf32>
    %8 = arith.addf %5, %7 : vector<1x1xf32>
    %c0_6 = arith.constant 0 : index
    %c0_7 = arith.constant 0 : index
    %9 = vector.load %arg5[%c0_6, %c0_7] : memref<1x32xf32, #tpu.memory_space<vmem>>, vector<1x32xf32>
    %10 = arith.mulf %1, %9 : vector<1x32xf32>
    %cst_8 = arith.constant dense<0.000000e+00> : vector<1xf32>
    %11 = vector.multi_reduction <add>, %10, %cst_8 [1] : vector<1x32xf32> to vector<1xf32>
    %12 = vector.shape_cast %11 : vector<1xf32> to vector<1x1xf32>
    %c0_9 = arith.constant 0 : index
    %c0_10 = arith.constant 0 : index
    %13 = memref.load %arg6[%c0_9, %c0_10] : memref<1x1xf32, #tpu.memory_space<smem>>
    %14 = vector.broadcast %13 : f32 to vector<1x1xf32>
    %15 = arith.addf %12, %14 : vector<1x1xf32>
    %cst_11 = arith.constant 0.000000e+00 : f32
    %16 = vector.broadcast %cst_11 : f32 to vector<1x1xf32>
    %17 = arith.maximumf %15, %16 : vector<1x1xf32>
    %18 = vector.shape_cast %8 : vector<1x1xf32> to vector<1x1x1xf32>
    %19 = vector.shape_cast %17 : vector<1x1xf32> to vector<1x1x1xf32>
    %c0_12 = arith.constant 0 : index
    %c0_13 = arith.constant 0 : index
    %c0_14 = arith.constant 0 : index
    %20 = vector.load %arg2[%c0_12, %c0_13, %c0_14] : memref<1x16x32xf32, #tpu.memory_space<vmem>>, vector<1x16x32xf32>
    %21 = vector.broadcast %19 : vector<1x1x1xf32> to vector<1x16x32xf32>
    %22 = arith.mulf %21, %20 : vector<1x16x32xf32>
    %23 = vector.broadcast %18 : vector<1x1x1xf32> to vector<1x16x32xf32>
    %24 = arith.addf %23, %22 : vector<1x16x32xf32>
    %25 = vector.shape_cast %24 : vector<1x16x32xf32> to vector<16x32xf32>
    %c0_15 = arith.constant 0 : index
    %c0_16 = arith.constant 0 : index
    %26 = vector.load %arg7[%c0_15, %c0_16] : memref<32x32xf32, #tpu.memory_space<vmem>>, vector<32x32xf32>
    %cst_17 = arith.constant dense<0.000000e+00> : vector<1x32xf32>
    %27 = tpu.matmul %1, %26, %cst_17 {dimension_numbers = #tpu.dot_dimension_numbers<[1], [0], [0], [1], [0, 0, 1, 1], [], []>} : vector<1x32xf32>, vector<32x32xf32>, vector<1x32xf32> -> vector<1x32xf32>
    %28 = vector.shape_cast %27 : vector<1x32xf32> to vector<1x1x32xf32>
    %29 = vector.shape_cast %28 : vector<1x1x32xf32> to vector<1x1x32xf32>
    %30 = vector.broadcast %29 : vector<1x1x32xf32> to vector<1x16x32xf32>
    %31 = vector.shape_cast %30 : vector<1x16x32xf32> to vector<16x32xf32>
    %c0_18 = arith.constant 0 : index
    %c0_19 = arith.constant 0 : index
    %32 = vector.load %arg8[%c0_18, %c0_19] : memref<32x32xf32, #tpu.memory_space<vmem>>, vector<32x32xf32>
    %cst_20 = arith.constant dense<0.000000e+00> : vector<16x32xf32>
    %33 = tpu.matmul %25, %32, %cst_20 {dimension_numbers = #tpu.dot_dimension_numbers<[1], [0], [0], [1], [0, 0, 1, 1], [], []>} : vector<16x32xf32>, vector<32x32xf32>, vector<16x32xf32> -> vector<16x32xf32>
    %34 = arith.addf %31, %33 : vector<16x32xf32>
    %cst_21 = arith.constant 0.000000e+00 : f32
    %35 = vector.broadcast %cst_21 : f32 to vector<16x32xf32>
    %36 = arith.maximumf %34, %35 : vector<16x32xf32>
    %c0_22 = arith.constant 0 : index
    %c0_23 = arith.constant 0 : index
    %37 = vector.load %arg9[%c0_22, %c0_23] : memref<32x128xf32, #tpu.memory_space<vmem>>, vector<32x128xf32>
    %cst_24 = arith.constant dense<0.000000e+00> : vector<16x128xf32>
    %38 = tpu.matmul %36, %37, %cst_24 {dimension_numbers = #tpu.dot_dimension_numbers<[1], [0], [0], [1], [0, 0, 1, 1], [], []>} : vector<16x32xf32>, vector<32x128xf32>, vector<16x128xf32> -> vector<16x128xf32>
    %cst_25 = arith.constant 0.000000e+00 : f32
    %39 = vector.broadcast %cst_25 : f32 to vector<16x128xf32>
    %40 = arith.maximumf %38, %39 : vector<16x128xf32>
    %c0_26 = arith.constant 0 : index
    %c0_27 = arith.constant 0 : index
    %41 = vector.load %arg10[%c0_26, %c0_27] : memref<16x128xf32, #tpu.memory_space<vmem>>, vector<16x128xf32>
    tpu.vector_store %arg10[%c0_26, %c0_27], %40 {strides = array<i32>} : memref<16x128xf32, #tpu.memory_space<vmem>>, vector<16x128xf32>,
    return
  }
  func.func @transform_0(%arg0: i32) -> (i32, i32, i32) {
    %c0_i32 = arith.constant 0 : i32
    %c0_i32_0 = arith.constant 0 : i32
    %c0_i32_1 = arith.constant 0 : i32
    return %arg0, %c0_i32, %c0_i32_0 : i32, i32, i32
  }
  func.func @transform_1(%arg0: i32) -> (i32, i32, i32) {
    %c0_i32 = arith.constant 0 : i32
    %c0_i32_0 = arith.constant 0 : i32
    %c0_i32_1 = arith.constant 0 : i32
    return %arg0, %c0_i32, %c0_i32_0 : i32, i32, i32
  }
  func.func @transform_2(%arg0: i32) -> (i32, i32) {
    %c0_i32 = arith.constant 0 : i32
    %c0_i32_0 = arith.constant 0 : i32
    %c0_i32_1 = arith.constant 0 : i32
    return %c0_i32, %c0_i32_0 : i32, i32
  }
  func.func @transform_3(%arg0: i32) -> (i32, i32) {
    %c0_i32 = arith.constant 0 : i32
    %c0_i32_0 = arith.constant 0 : i32
    %c0_i32_1 = arith.constant 0 : i32
    return %c0_i32, %c0_i32_0 : i32, i32
  }
  func.func @transform_4(%arg0: i32) -> (i32, i32) {
    %c0_i32 = arith.constant 0 : i32
    %c0_i32_0 = arith.constant 0 : i32
    %c0_i32_1 = arith.constant 0 : i32
    return %c0_i32, %c0_i32_0 : i32, i32
  }
  func.func @transform_5(%arg0: i32) -> (i32, i32) {
    %c0_i32 = arith.constant 0 : i32
    %c0_i32_0 = arith.constant 0 : i32
    %c0_i32_1 = arith.constant 0 : i32
    return %c0_i32, %c0_i32_0 : i32, i32
  }
  func.func @transform_6(%arg0: i32) -> (i32, i32) {
    %c0_i32 = arith.constant 0 : i32
    %c0_i32_0 = arith.constant 0 : i32
    %c0_i32_1 = arith.constant 0 : i32
    return %c0_i32, %c0_i32_0 : i32, i32
  }
  func.func @transform_7(%arg0: i32) -> (i32, i32) {
    %c0_i32 = arith.constant 0 : i32
    %c0_i32_0 = arith.constant 0 : i32
    %c0_i32_1 = arith.constant 0 : i32
    return %c0_i32, %c0_i32_0 : i32, i32
  }
  func.func @transform_8(%arg0: i32) -> (i32, i32) {
    %c0_i32 = arith.constant 0 : i32
    %c0_i32_0 = arith.constant 0 : i32
    %c0_i32_1 = arith.constant 0 : i32
    return %c0_i32, %c0_i32_0 : i32, i32
  }
  func.func @transform_9(%arg0: i32) -> (i32, i32) {
    %c0_i32 = arith.constant 0 : i32
    %c0_i32_0 = arith.constant 0 : i32
    return %arg0, %c0_i32 : i32, i32
  }
}

</mosaic_0001>

<llo_original>
// kernel: tpu_custom_call.1
$region0: #{tpu_custom_call.1}
  #allocation0 [shape = 'u32[]', space=smem, size = 0x4, offset = 0x4, fixed_abs, tag = 'smem constant byte address 0x4 - core index']
  #allocation1 [shape = 'u32[72,128]{1,0:T(1,128)}', space=vmem, size = 0x9000, scoped, tag = 'internal scratch']
  #allocation2 [shape = 'f32[1,1]{1,0:T(1,128)S(6)}', space=smem, size = 0x200, scoped, tag = 'scoped memory for tpu_custom_call.1']
  #allocation3 [shape = 'f32[1,1]{1,0:T(1,128)S(6)}', space=smem, size = 0x200, scoped, tag = 'scoped memory for tpu_custom_call.1']
  %s0 = inlined_call_operand.vmem [shape: f32[2,1,32], index: 0, kind: input, shape index: {}]
  %s1 = inlined_call_operand.hbm [shape: f32[2,16,32], index: 1, kind: input, shape index: {}]
  %s2 = inlined_call_operand.vmem [shape: f32[1,32], index: 2, kind: input, shape index: {}]
  %s3 = inlined_call_operand.<no memory space> [shape: f32[1,1], index: 3, kind: input, shape index: {}]
  %s4 = inlined_call_operand.vmem [shape: f32[1,32], index: 4, kind: input, shape index: {}]
  %s5 = inlined_call_operand.<no memory space> [shape: f32[1,1], index: 5, kind: input, shape index: {}]
  %s6 = inlined_call_operand.hbm [shape: f32[32,32], index: 6, kind: input, shape index: {}]
  %s7 = inlined_call_operand.hbm [shape: f32[32,32], index: 7, kind: input, shape index: {}]
  %s8 = inlined_call_operand.hbm [shape: f32[32,128], index: 8, kind: input, shape index: {}]
  %s9 = inlined_call_operand.hbm [shape: f32[32,128], index: 9, kind: output, shape index: {}]
  %s10 = sld [smem:[#allocation0]]
  $region85: #{tpu_custom_call.1} parent=0
    _
  %s12 = ssub.s32 1, %s10
  %s13 = scalar_select 0, %s12, %s10
  %14 = sst [smem:[#allocation2]] %s3
  %15 = sst [smem:[#allocation3]] %s5
  $region1: #{tpu_custom_call.1} parent=0
    #allocation4 [shape = 'u8[16384]{0}', space=vmem, size = 0x4000, scoped, tag = 'input window, operand 1']
    #allocation5 [shape = 's32[2]{0}', space=sflag, size = 0x8, scoped, tag = 'scoped memory for tpu_custom_call.1']
    #allocation6 [shape = 's32[2]{0}', space=sflag, size = 0x8, scoped, tag = 'scoped memory for tpu_custom_call.1']
    #allocation7 [shape = 'u8[16384]{0}', space=vmem, size = 0x4000, scoped, tag = 'input window, operand 6, single buffered']
    #allocation8 [shape = 's32[1]{0}', space=sflag, size = 0x4, scoped, tag = 'scoped memory for tpu_custom_call.1']
    #allocation9 [shape = 'u8[16384]{0}', space=vmem, size = 0x4000, scoped, tag = 'input window, operand 7, single buffered']
    #allocation10 [shape = 'u8[16384]{0}', space=vmem, size = 0x4000, scoped, tag = 'input window, operand 8, single buffered']
    #allocation11 [shape = 's32[1]{0}', space=sflag, size = 0x4, scoped, tag = 'scoped memory for tpu_custom_call.1']
    #allocation12 [shape = 'u8[16384]{0}', space=vmem, size = 0x4000, scoped, tag = 'output window, operand 0']
    %16 = vsyncpa [#allocation5], 0
    %s17 = scalar_lea.sflag [#allocation5], 1
    %18 = vsyncpa %s17, 0
    %19 = vsyncpa [#allocation8], 0
    %20 = vsyncpa [#allocation11], 0
    %21 = vsyncpa [#allocation6], 0
    %s22 = scalar_lea.sflag [#allocation6], 1
    %23 = vsyncpa %s22, 0
    loop: start=0, step=1, limit=4
    $region2: #{tpu_custom_call.1} parent=1 // loop_pre_header
      _
    $region3: #{tpu_custom_call.1} parent=1 // loop_header
      %s25 = sphi 0, %s29
      %p26 = scmp.ge.s32.totalorder %s25, 4
      %s35 = sphi 0, %s37
      %s38 = sphi 0, %s35
      %s39 = sphi 0, %s38
      %s55 = sphi 0, %s39
      %s61 = sphi 0, %s63
      %s64 = sphi 0, %s61
      %s65 = sphi 0, %s64
      %s81 = sphi 0, %s65
      %s85 = sphi 0, %s85
      %s87 = sphi 0, %s85
      %s88 = sphi 0, %s87
      %s102 = sphi 0, %s88
      %s106 = sphi 0, %s106
      %s108 = sphi 0, %s106
      %s109 = sphi 0, %s108
      %s123 = sphi 0, %s109
      %s127 = sphi 0, %s127
      %s129 = sphi 0, %s127
      %s130 = sphi 0, %s129
      %s144 = sphi 0, %s130
      %s148 = sphi 0, %s148
      %s150 = sphi 0, %s148
      %s151 = sphi 0, %s150
      %s165 = sphi 0, %s151
      %s169 = sphi 0, %s169
      %s171 = sphi 0, %s169
      %s172 = sphi 0, %s171
      %s186 = sphi 0, %s172
      %s190 = sphi 0, %s190
      %s192 = sphi 0, %s190
      %s193 = sphi 0, %s192
      %s207 = sphi 0, %s193
      %s211 = sphi 0, %s211
      %s213 = sphi 0, %s211
      %s214 = sphi 0, %s213
      %s228 = sphi 0, %s214
      %s234 = sphi 0, %s236
      %s237 = sphi 0, %s234
      %s238 = sphi 0, %s237
      %s254 = sphi 0, %s238
    $region4: #{tpu_custom_call.1} parent=1 // loop_header_branch
      %28 = sbr.rel (%p26) target = $region8
    $region5: #{tpu_custom_call.1} parent=1 // loop_body
      %s30 = ssub.s32 %s25, 1
      %s31 = ssub.s32 %s25, 2
      %s32 = sadd.s32 %s25, 1
      %s33 = ssub.s32 %s25, %s32
      %p34 = scmp.eq.s32.totalorder %s33, 0
      %s36 = sadd.s32 %s35, 1
      %s37 = scalar_select %p34, %s35, %s36
      %p40 = pneg %p34
      %p41 = scmp.eq.s32.totalorder %s25, 1
      %p42 = por %p40, %p41
      %p43 = scmp.ne.s32.totalorder %s35, %s38
      %p44 = scmp.eq.s32.totalorder %s25, 0
      %p45 = por %p43, %p44
      %p46 = scmp.ne.s32.totalorder %s35, %s38
      %p47 = scmp.eq.s32.totalorder %s30, 1
      %p48 = por %p46, %p47
      %p49 = scmp.ne.s32.totalorder %s38, %s39
      %p50 = scmp.eq.s32.totalorder %s30, 0
      %p51 = por %p49, %p50
      %p52 = scmp.ne.s32.totalorder %s38, %s39
      %p53 = scmp.eq.s32.totalorder %s31, 1
      %p54 = por %p52, %p53
      %p56 = scmp.ne.s32.totalorder %s39, %s55
      %p57 = scmp.eq.s32.totalorder %s31, 0
      %p58 = por %p56, %p57
      %s59 = ssub.s32 %s25, %s32
      %p60 = scmp.eq.s32.totalorder %s59, 0
      %s62 = sadd.s32 %s61, 1
      %s63 = scalar_select %p60, %s61, %s62
      %p66 = pneg %p60
      %p67 = scmp.eq.s32.totalorder %s25, 1
      %p68 = por %p66, %p67
      %p69 = scmp.ne.s32.totalorder %s61, %s64
      %p70 = scmp.eq.s32.totalorder %s25, 0
      %p71 = por %p69, %p70
      %p72 = scmp.ne.s32.totalorder %s61, %s64
      %p73 = scmp.eq.s32.totalorder %s30, 1
      %p74 = por %p72, %p73
      %p75 = scmp.ne.s32.totalorder %s64, %s65
      %p76 = scmp.eq.s32.totalorder %s30, 0
      %p77 = por %p75, %p76
      %p78 = scmp.ne.s32.totalorder %s64, %s65
      %p79 = scmp.eq.s32.totalorder %s31, 1
      %p80 = por %p78, %p79
      %p82 = scmp.ne.s32.totalorder %s65, %s81
      %p83 = scmp.eq.s32.totalorder %s31, 0
      %p84 = por %p82, %p83
      %s86 = sadd.s32 %s85, 1
      %p89 = scmp.eq.s32.totalorder %s25, 1
      %p90 = scmp.ne.s32.totalorder %s85, %s87
      %p91 = scmp.eq.s32.totalorder %s25, 0
      %p92 = por %p90, %p91
      %p93 = scmp.ne.s32.totalorder %s85, %s87
      %p94 = scmp.eq.s32.totalorder %s30, 1
      %p95 = por %p93, %p94
      %p96 = scmp.ne.s32.totalorder %s87, %s88
      %p97 = scmp.eq.s32.totalorder %s30, 0
      %p98 = por %p96, %p97
      %p99 = scmp.ne.s32.totalorder %s87, %s88
      %p100 = scmp.eq.s32.totalorder %s31, 1
      %p101 = por %p99, %p100
      %p103 = scmp.ne.s32.totalorder %s88, %s102
      %p104 = scmp.eq.s32.totalorder %s31, 0
      %p105 = por %p103, %p104
      %s107 = sadd.s32 %s106, 1
      %p110 = scmp.eq.s32.totalorder %s25, 1
      %p111 = scmp.ne.s32.totalorder %s106, %s108
      %p112 = scmp.eq.s32.totalorder %s25, 0
      %p113 = por %p111, %p112
      %p114 = scmp.ne.s32.totalorder %s106, %s108
      %p115 = scmp.eq.s32.totalorder %s30, 1
      %p116 = por %p114, %p115
      %p117 = scmp.ne.s32.totalorder %s108, %s109
      %p118 = scmp.eq.s32.totalorder %s30, 0
      %p119 = por %p117, %p118
      %p120 = scmp.ne.s32.totalorder %s108, %s109
      %p121 = scmp.eq.s32.totalorder %s31, 1
      %p122 = por %p120, %p121
      %p124 = scmp.ne.s32.totalorder %s109, %s123
      %p125 = scmp.eq.s32.totalorder %s31, 0
      %p126 = por %p124, %p125
      %s128 = sadd.s32 %s127, 1
      %p131 = scmp.eq.s32.totalorder %s25, 1
      %p132 = scmp.ne.s32.totalorder %s127, %s129
      %p133 = scmp.eq.s32.totalorder %s25, 0
      %p134 = por %p132, %p133
      %p135 = scmp.ne.s32.totalorder %s127, %s129
      %p136 = scmp.eq.s32.totalorder %s30, 1
      %p137 = por %p135, %p136
      %p138 = scmp.ne.s32.totalorder %s129, %s130
      %p139 = scmp.eq.s32.totalorder %s30, 0
      %p140 = por %p138, %p139
      %p141 = scmp.ne.s32.totalorder %s129, %s130
      %p142 = scmp.eq.s32.totalorder %s31, 1
      %p143 = por %p141, %p142
      %p145 = scmp.ne.s32.totalorder %s130, %s144
      %p146 = scmp.eq.s32.totalorder %s31, 0
      %p147 = por %p145, %p146
      %s149 = sadd.s32 %s148, 1
      %p152 = scmp.eq.s32.totalorder %s25, 1
      %p153 = scmp.ne.s32.totalorder %s148, %s150
      %p154 = scmp.eq.s32.totalorder %s25, 0
      %p155 = por %p153, %p154
      %p156 = scmp.ne.s32.totalorder %s148, %s150
      %p157 = scmp.eq.s32.totalorder %s30, 1
      %p158 = por %p156, %p157
      %p159 = scmp.ne.s32.totalorder %s150, %s151
      %p160 = scmp.eq.s32.totalorder %s30, 0
      %p161 = por %p159, %p160
      %p162 = scmp.ne.s32.totalorder %s150, %s151
      %p163 = scmp.eq.s32.totalorder %s31, 1
      %p164 = por %p162, %p163
      %p166 = scmp.ne.s32.totalorder %s151, %s165
      %p167 = scmp.eq.s32.totalorder %s31, 0
      %p168 = por %p166, %p167
      %s170 = sadd.s32 %s169, 1
      %p173 = scmp.eq.s32.totalorder %s25, 1
      %p174 = scmp.ne.s32.totalorder %s169, %s171
      %p175 = scmp.eq.s32.totalorder %s25, 0
      %p176 = por %p174, %p175
      %p177 = scmp.ne.s32.totalorder %s169, %s171
      %p178 = scmp.eq.s32.totalorder %s30, 1
      %p179 = por %p177, %p178
      %p180 = scmp.ne.s32.totalorder %s171, %s172
      %p181 = scmp.eq.s32.totalorder %s30, 0
      %p182 = por %p180, %p181
      %p183 = scmp.ne.s32.totalorder %s171, %s172
      %p184 = scmp.eq.s32.totalorder %s31, 1
      %p185 = por %p183, %p184
      %p187 = scmp.ne.s32.totalorder %s172, %s186
      %p188 = scmp.eq.s32.totalorder %s31, 0
      %p189 = por %p187, %p188
      %s191 = sadd.s32 %s190, 1
      %p194 = scmp.eq.s32.totalorder %s25, 1
      %p195 = scmp.ne.s32.totalorder %s190, %s192
      %p196 = scmp.eq.s32.totalorder %s25, 0
      %p197 = por %p195, %p196
      %p198 = scmp.ne.s32.totalorder %s190, %s192
      %p199 = scmp.eq.s32.totalorder %s30, 1
      %p200 = por %p198, %p199
      %p201 = scmp.ne.s32.totalorder %s192, %s193
      %p202 = scmp.eq.s32.totalorder %s30, 0
      %p203 = por %p201, %p202
      %p204 = scmp.ne.s32.totalorder %s192, %s193
      %p205 = scmp.eq.s32.totalorder %s31, 1
      %p206 = por %p204, %p205
      %p208 = scmp.ne.s32.totalorder %s193, %s207
      %p209 = scmp.eq.s32.totalorder %s31, 0
      %p210 = por %p208, %p209
      %s212 = sadd.s32 %s211, 1
      %p215 = scmp.eq.s32.totalorder %s25, 1
      %p216 = scmp.ne.s32.totalorder %s211, %s213
      %p217 = scmp.eq.s32.totalorder %s25, 0
      %p218 = por %p216, %p217
      %p219 = scmp.ne.s32.totalorder %s211, %s213
      %p220 = scmp.eq.s32.totalorder %s30, 1
      %p221 = por %p219, %p220
      %p222 = scmp.ne.s32.totalorder %s213, %s214
      %p223 = scmp.eq.s32.totalorder %s30, 0
      %p224 = por %p222, %p223
      %p225 = scmp.ne.s32.totalorder %s213, %s214
      %p226 = scmp.eq.s32.totalorder %s31, 1
      %p227 = por %p225, %p226
      %p229 = scmp.ne.s32.totalorder %s214, %s228
      %p230 = scmp.eq.s32.totalorder %s31, 0
      %p231 = por %p229, %p230
      %s232 = ssub.s32 %s25, %s32
      %p233 = scmp.eq.s32.totalorder %s232, 0
      %s235 = sadd.s32 %s234, 1
      %s236 = scalar_select %p233, %s234, %s235
      %p239 = pneg %p233
      %p240 = scmp.eq.s32.totalorder %s25, 1
      %p241 = por %p239, %p240
      %p242 = scmp.ne.s32.totalorder %s234, %s237
      %p243 = scmp.eq.s32.totalorder %s25, 0
      %p244 = por %p242, %p243
      %p245 = scmp.ne.s32.totalorder %s234, %s237
      %p246 = scmp.eq.s32.totalorder %s30, 1
      %p247 = por %p245, %p246
      %p248 = scmp.ne.s32.totalorder %s237, %s238
      %p249 = scmp.eq.s32.totalorder %s30, 0
      %p250 = por %p248, %p249
      %p251 = scmp.ne.s32.totalorder %s237, %s238
      %p252 = scmp.eq.s32.totalorder %s31, 1
      %p253 = por %p251, %p252
      %p255 = scmp.ne.s32.totalorder %s238, %s254
      %p256 = scmp.eq.s32.totalorder %s31, 0
      %p257 = por %p255, %p256
      %p258 = scmp.le.s32.totalorder 1, %s25
      %p259 = scmp.lt.s32.totalorder %s25, 3
      %p260 = pnand %p258, %p259
      %p261 = pneg %p260
      // Predicated region
      $region9: #{tpu_custom_call.1} parent=5 // pred_check
        _
      $region10: #{tpu_custom_call.1} parent=5 // pred_check_branch
        %263 = sbr.rel (%p260) target = $region12
      $region11: #{tpu_custom_call.1} parent=5 // pred_region
        %s264 = ssub.s32 %s25, 1
        // Predicated region
        $region13: #{tpu_custom_call.1} parent=11 // pred_check
          %p265 = pneg %p98
        $region14: #{tpu_custom_call.1} parent=11 // pred_check_branch
          %267 = sbr.rel (%p265) target = $region16
        $region15: #{tpu_custom_call.1} parent=11 // pred_region
          _
        $region16: #{tpu_custom_call.1} parent=11 // pred_fallthru
          _
        // Predicated region
        $region17: #{tpu_custom_call.1} parent=11 // pred_check
          %p268 = pneg %p119
        $region18: #{tpu_custom_call.1} parent=11 // pred_check_branch
          %270 = sbr.rel (%p268) target = $region20
        $region19: #{tpu_custom_call.1} parent=11 // pred_region
          _
        $region20: #{tpu_custom_call.1} parent=11 // pred_fallthru
          _
        // Predicated region
        $region21: #{tpu_custom_call.1} parent=11 // pred_check
          %p271 = pneg %p140
        $region22: #{tpu_custom_call.1} parent=11 // pred_check_branch
          %273 = sbr.rel (%p271) target = $region24
        $region23: #{tpu_custom_call.1} parent=11 // pred_region
          _
        $region24: #{tpu_custom_call.1} parent=11 // pred_fallthru
          _
        // Predicated region
        $region25: #{tpu_custom_call.1} parent=11 // pred_check
          %p274 = pneg %p161
        $region26: #{tpu_custom_call.1} parent=11 // pred_check_branch
          %276 = sbr.rel (%p274) target = $region28
        $region27: #{tpu_custom_call.1} parent=11 // pred_region
          _
        $region28: #{tpu_custom_call.1} parent=11 // pred_fallthru
          _
        // Predicated region
        $region29: #{tpu_custom_call.1} parent=11 // pred_check
          %p277 = pneg %p182
        $region30: #{tpu_custom_call.1} parent=11 // pred_check_branch
          %279 = sbr.rel (%p277) target = $region32
        $region31: #{tpu_custom_call.1} parent=11 // pred_region
          %281 = vsyncadd [#allocation8], 0
          %s282 = sshll.u32 %s6, 4
          %s283 = int_to_ptr.hbm [resolvable:$true] %s282
          %s284 = sshll.u32 [#allocation7], 4
          %s285 = int_to_ptr.vmem [resolvable:$true] %s284
          %290 = dma.hbm_to_vmem [thread:$0]  %s283, 512, %s285, [#allocation8], 128, 128, 8
        $region32: #{tpu_custom_call.1} parent=11 // pred_fallthru
          _
        // Predicated region
        $region33: #{tpu_custom_call.1} parent=11 // pred_check
          %p291 = pneg %p203
        $region34: #{tpu_custom_call.1} parent=11 // pred_check_branch
          %293 = sbr.rel (%p291) target = $region36
        $region35: #{tpu_custom_call.1} parent=11 // pred_region
          %295 = vsyncadd [#allocation8], 0
          %s296 = sshll.u32 %s7, 4
          %s297 = int_to_ptr.hbm [resolvable:$true] %s296
          %s298 = sshll.u32 [#allocation9], 4
          %s299 = int_to_ptr.vmem [resolvable:$true] %s298
          %304 = dma.hbm_to_vmem [thread:$0]  %s297, 512, %s299, [#allocation8], 128, 128, 8
        $region36: #{tpu_custom_call.1} parent=11 // pred_fallthru
          _
        // Predicated region
        $region37: #{tpu_custom_call.1} parent=11 // pred_check
          %p305 = pneg %p224
        $region38: #{tpu_custom_call.1} parent=11 // pred_check_branch
          %307 = sbr.rel (%p305) target = $region40
        $region39: #{tpu_custom_call.1} parent=11 // pred_region
          %309 = vsyncadd [#allocation11], 0
          %s310 = sshll.u32 %s8, 4
          %s311 = int_to_ptr.hbm [resolvable:$true] %s310
          %s312 = sshll.u32 [#allocation10], 4
          %s313 = int_to_ptr.vmem [resolvable:$true] %s312
          %318 = dma.hbm_to_vmem [thread:$0]  %s311, 512, %s313, [#allocation11], 128, 128, 8
        $region40: #{tpu_custom_call.1} parent=11 // pred_fallthru
          _
      $region12: #{tpu_custom_call.1} parent=5 // pred_fallthru
        _
      %p319 = scmp.lt.s32.totalorder %s25, 2
      // Predicated region
      $region41: #{tpu_custom_call.1} parent=5 // pred_check
        %p320 = pneg %p319
      $region42: #{tpu_custom_call.1} parent=5 // pred_check_branch
        %322 = sbr.rel (%p320) target = $region44
      $region43: #{tpu_custom_call.1} parent=5 // pred_region
        // Predicated region
        $region45: #{tpu_custom_call.1} parent=43 // pred_check
          %p323 = pneg %p45
        $region46: #{tpu_custom_call.1} parent=43 // pred_check_branch
          %325 = sbr.rel (%p323) target = $region48
        $region47: #{tpu_custom_call.1} parent=43 // pred_region
          %p326 = scmp.lt.s32.totalorder %s25, 1
          %s327 = scalar_select %p326, %s25, 1
          %s328 = scalar_lea.vmem %s0, %s327
        $region48: #{tpu_custom_call.1} parent=43 // pred_fallthru
          _
        // Predicated region
        $region49: #{tpu_custom_call.1} parent=43 // pred_check
          %p329 = pneg %p71
        $region50: #{tpu_custom_call.1} parent=43 // pred_check_branch
          %331 = sbr.rel (%p329) target = $region52
        $region51: #{tpu_custom_call.1} parent=43 // pred_region
          %s332 = sand.u32 %s61, 1
          %s333 = scalar_lea.sflag [#allocation5], %s332
          %s334 = sand.u32 %s61, 1
          %s335 = smul.addr %s334, 16
          %s336 = scalar_lea.vmem [#allocation4], %s335
          %338 = vsyncadd %s333, 0
          %s339 = smul.addr %s25, 2
          %s340 = smul.addr %s339, 8
          %s341 = scalar_lea.hbm %s1, %s340
          %s342 = sshll.u32 %s341, 4
          %s343 = int_to_ptr.hbm [resolvable:$true] %s342
          %s344 = sshll.u32 %s336, 4
          %s345 = int_to_ptr.vmem [resolvable:$true] %s344
          %350 = dma.hbm_to_vmem [thread:$0]  %s343, 256, %s345, %s333, 128, 128, 8
        $region52: #{tpu_custom_call.1} parent=43 // pred_fallthru
          _
      $region44: #{tpu_custom_call.1} parent=5 // pred_fallthru
        _
      %p351 = scmp.le.s32.totalorder 1, %s25
      %p352 = scmp.lt.s32.totalorder %s25, 3
      %p353 = pnand %p351, %p352
      %p354 = pneg %p353
      // Predicated region
      $region53: #{tpu_custom_call.1} parent=5 // pred_check
        _
      $region54: #{tpu_custom_call.1} parent=5 // pred_check_branch
        %356 = sbr.rel (%p353) target = $region56
      $region55: #{tpu_custom_call.1} parent=5 // pred_region
        %s357 = ssub.s32 %s25, 1
        %s358 = sand.u32 %s64, 1
        %s359 = scalar_lea.sflag [#allocation5], %s358
        %s360 = sand.u32 %s64, 1
        %s361 = smul.addr %s360, 16
        %s362 = scalar_lea.vmem [#allocation4], %s361
        // Predicated region
        $region57: #{tpu_custom_call.1} parent=55 // pred_check
          %p363 = pneg %p77
        $region58: #{tpu_custom_call.1} parent=55 // pred_check_branch
          %365 = sbr.rel (%p363) target = $region60
        $region59: #{tpu_custom_call.1} parent=55 // pred_region
          %367 = dma.done %s359, 256
        $region60: #{tpu_custom_call.1} parent=55 // pred_fallthru
          _
        // Predicated region
        $region61: #{tpu_custom_call.1} parent=55 // pred_check
          %p368 = pneg %p182
        $region62: #{tpu_custom_call.1} parent=55 // pred_check_branch
          %370 = sbr.rel (%p368) target = $region64
        $region63: #{tpu_custom_call.1} parent=55 // pred_region
          %372 = dma.done [#allocation8], 512
        $region64: #{tpu_custom_call.1} parent=55 // pred_fallthru
          _
        // Predicated region
        $region65: #{tpu_custom_call.1} parent=55 // pred_check
          %p373 = pneg %p203
        $region66: #{tpu_custom_call.1} parent=55 // pred_check_branch
          %375 = sbr.rel (%p373) target = $region68
        $region67: #{tpu_custom_call.1} parent=55 // pred_region
          %377 = dma.done [#allocation8], 512
        $region68: #{tpu_custom_call.1} parent=55 // pred_fallthru
          _
        // Predicated region
        $region69: #{tpu_custom_call.1} parent=55 // pred_check
          %p378 = pneg %p224
        $region70: #{tpu_custom_call.1} parent=55 // pred_check_branch
          %380 = sbr.rel (%p378) target = $region72
        $region71: #{tpu_custom_call.1} parent=55 // pred_region
          %382 = dma.done [#allocation11], 512
        $region72: #{tpu_custom_call.1} parent=55 // pred_fallthru
          _
        %p383 = scmp.lt.s32.totalorder %s30, 1
        %s384 = scalar_select %p383, %s30, 1
        %s385 = scalar_lea.vmem %s0, %s384
        %p386 = pneg %p51
        %p387 = pneg %p48
        %s388 = sand.u32 %s64, 1
        %s389 = scalar_lea.sflag [#allocation5], %s388
        %s390 = sand.u32 %s64, 1
        %s391 = smul.addr %s390, 16
        %s392 = scalar_lea.vmem [#allocation4], %s391
        %p393 = pneg %p77
        %p394 = pneg %p74
        %p395 = pneg %p98
        %p396 = pneg %p95
        %p397 = pneg %p119
        %p398 = pneg %p116
        %p399 = pneg %p140
        %p400 = pneg %p137
        %p401 = pneg %p161
        %p402 = pneg %p158
        %p403 = pneg %p182
        %p404 = pneg %p179
        %p405 = pneg %p203
        %p406 = pneg %p200
        %p407 = pneg %p224
        %p408 = pneg %p221
        %p409 = pneg %p250
        %p410 = pneg %p247
        %s411 = sand.u32 %s237, 1
        %s412 = scalar_lea.sflag [#allocation6], %s411
        %s413 = sand.u32 %s237, 1
        %s414 = smul.addr %s413, 16
        %s415 = scalar_lea.vmem [#allocation12], %s414
        %p416 = scmp.lt.s32.totalorder %s30, 1
        %s417 = scalar_select %p416, %s30, 1
        %s418 = scalar_lea.vmem %s0, %s417
        %s419 = smul.u32 2, %s30
        %v420 = vld [vmem:[%s418] sm:$0x1]
        %v421 = vld [vmem:[%s2] sm:$0x1]
        %v422 = vmul.f32 %v420, %v421
        %vm423 = vcmask 253952
        %v424 = vsel %vm423, %v422, 0.0
        %425 = vadd.xlane.f32.xlu0 %v424
        %v426 = vpop.xlane.xlu0 %425
        %s427 = sld [smem:[#allocation2]]
        %v428 = vstv %s427
        %v429 = vadd.f32 %v426, %v428
        %v430 = vld [vmem:[%s4] sm:$0x1]
        %v431 = vmul.f32 %v420, %v430
        %v432 = vsel %vm423, %v431, 0.0
        %433 = vadd.xlane.f32.xlu0 %v432
        %v434 = vpop.xlane.xlu0 %433
        %s435 = sld [smem:[#allocation3]]
        %v436 = vstv %s435
        %v437 = vadd.f32 %v434, %v436
        %v438 = vmax.f32 %v437, 0.0
        %v439 = vld [vmem:[%s362] sm:$0xff]
        %v440 = vld [vmem:[%s362 + $0x8] sm:$0xff]
        %v441 = vperm.slane %v438, 0
        %v442 = vmul.f32 %v441, %v439
        %v443 = vmul.f32 %v441, %v440
        %v444 = vperm.slane %v429, 0
        %v445 = vadd.f32 %v444, %v442
        %v446 = vadd.f32 %v444, %v443
        %v447 = vld [vmem:[#allocation7] sm:$0xff]
        %v448 = vld [vmem:[#allocation7 + $0x8] sm:$0xff]
        %v449 = vld [vmem:[#allocation7 + $0x10] sm:$0xff]
        %v450 = vld [vmem:[#allocation7 + $0x18] sm:$0xff]
        %vm451 = vcmask 261120
        %v453 = vsel %vm451, %v420, 0
        %455 = vmatpush.msra.mxu0 0.0
        %456 = vmatpush.msra.mxu0 0.0
        %457 = vmatpush.msra.mxu0 0.0
        %458 = vmatpush.msra.mxu0 0.0
        %459 = vmatpush.msra.mxu0 0.0
        %460 = vmatpush.msra.mxu0 0.0
        %461 = vmatpush.msra.mxu0 0.0
        %462 = vmatpush.msra.mxu0 0.0
        %463 = vmatpush.msra.mxu0 0.0
        %464 = vmatpush.msra.mxu0 0.0
        %465 = vmatpush.msra.mxu0 0.0
        %466 = vmatpush.msra.mxu0 0.0
        %467 = vmatpush.msra.mxu0 %v450
        %468 = vmatpush.msra.mxu0 %v449
        %469 = vmatpush.msra.mxu0 %v448
        %470 = vmatpush.msra.mxu0 %v447
        %471 = vmatmul.f32.gmra.mxu0 %v453
        %v472 = vpop.f32.mrf.mxu0
        %v473 = vadd.f32 0.0, %v472
        %474 = vdwg.mxu0
        %v475 = vperm.slane %v473, 0
        %v476 = vld [vmem:[#allocation9] sm:$0xff]
        %v477 = vld [vmem:[#allocation9 + $0x8] sm:$0xff]
        %v478 = vld [vmem:[#allocation9 + $0x10] sm:$0xff]
        %v479 = vld [vmem:[#allocation9 + $0x18] sm:$0xff]
        %v481 = vsel %vm451, %v445, 0
        %v484 = vsel %vm451, %v446, 0
        %486 = vmatpush.msra.mxu0 0.0
        %487 = vmatpush.msra.mxu0 0.0
        %488 = vmatpush.msra.mxu0 0.0
        %489 = vmatpush.msra.mxu0 0.0
        %490 = vmatpush.msra.mxu0 0.0
        %491 = vmatpush.msra.mxu0 0.0
        %492 = vmatpush.msra.mxu0 0.0
        %493 = vmatpush.msra.mxu0 0.0
        %494 = vmatpush.msra.mxu0 0.0
        %495 = vmatpush.msra.mxu0 0.0
        %496 = vmatpush.msra.mxu0 0.0
        %497 = vmatpush.msra.mxu0 0.0
        %498 = vmatpush.msra.mxu0 %v479
        %499 = vmatpush.msra.mxu0 %v478
        %500 = vmatpush.msra.mxu0 %v477
        %501 = vmatpush.msra.mxu0 %v476
        %502 = vmatmul.f32.gmra.mxu0 %v481
        %v503 = vpop.f32.mrf.mxu0
        %v504 = vadd.f32 0.0, %v503
        %505 = vmatmul.f32.gmra.mxu0 %v484
        %v506 = vpop.f32.mrf.mxu0
        %v507 = vadd.f32 0.0, %v506
        %508 = vdwg.mxu0
        %v509 = vadd.f32 %v475, %v504
        %v510 = vadd.f32 %v475, %v507
        %v511 = vmax.f32 %v509, 0.0
        %v512 = vmax.f32 %v510, 0.0
        %v513 = vld [vmem:[#allocation10] sm:$0xff]
        %v514 = vld [vmem:[#allocation10 + $0x8] sm:$0xff]
        %v515 = vld [vmem:[#allocation10 + $0x10] sm:$0xff]
        %v516 = vld [vmem:[#allocation10 + $0x18] sm:$0xff]
        %v518 = vsel %vm451, %v511, 0
        %v521 = vsel %vm451, %v512, 0
        %523 = vmatpush.msra.mxu0 0.0
        %524 = vmatpush.msra.mxu0 0.0
        %525 = vmatpush.msra.mxu0 0.0
        %526 = vmatpush.msra.mxu0 0.0
        %527 = vmatpush.msra.mxu0 0.0
        %528 = vmatpush.msra.mxu0 0.0
        %529 = vmatpush.msra.mxu0 0.0
        %530 = vmatpush.msra.mxu0 0.0
        %531 = vmatpush.msra.mxu0 0.0
        %532 = vmatpush.msra.mxu0 0.0
        %533 = vmatpush.msra.mxu0 0.0
        %534 = vmatpush.msra.mxu0 0.0
        %535 = vmatpush.msra.mxu0 %v516
        %536 = vmatpush.msra.mxu0 %v515
        %537 = vmatpush.msra.mxu0 %v514
        %538 = vmatpush.msra.mxu0 %v513
        %539 = vmatmul.f32.gmra.mxu0 %v518
        %v540 = vpop.f32.mrf.mxu0
        %v541 = vadd.f32 0.0, %v540
        %542 = vmatmul.f32.gmra.mxu0 %v521
        %v543 = vpop.f32.mrf.mxu0
        %v544 = vadd.f32 0.0, %v543
        %545 = vdwg.mxu0
        %v546 = vmax.f32 %v541, 0.0
        %v547 = vmax.f32 %v544, 0.0
        %548 = vst [vmem:[%s415] sm:$0xff] %v546
        %549 = vst [vmem:[%s415 + $0x8] sm:$0xff] %v547
        %s550 = sand.u32 %s237, 1
        %s551 = scalar_lea.sflag [#allocation6], %s550
        %s552 = sand.u32 %s237, 1
        %s553 = smul.addr %s552, 16
        %s554 = scalar_lea.vmem [#allocation12], %s553
        // Predicated region
        $region73: #{tpu_custom_call.1} parent=55 // pred_check
          %p555 = pneg %p247
        $region74: #{tpu_custom_call.1} parent=55 // pred_check_branch
          %557 = sbr.rel (%p555) target = $region76
        $region75: #{tpu_custom_call.1} parent=55 // pred_region
          %s558 = smul.u32 2, %s30
          %560 = vsyncadd %s551, 0
          %s561 = smul.addr %s558, 8
          %s562 = scalar_lea.hbm %s9, %s561
          %s563 = sshll.u32 %s554, 4
          %s564 = int_to_ptr.vmem [resolvable:$true] %s563
          %s565 = sshll.u32 %s562, 4
          %s566 = int_to_ptr.hbm [resolvable:$true] %s565
          %571 = dma.vmem_to_hbm [thread:$0]  %s564, 256, %s566, %s551, 128, 128, 8
        $region76: #{tpu_custom_call.1} parent=55 // pred_fallthru
          _
      $region56: #{tpu_custom_call.1} parent=5 // pred_fallthru
        _
      %p572 = scmp.le.s32.totalorder 2, %s25
      // Predicated region
      $region77: #{tpu_custom_call.1} parent=5 // pred_check
        %p573 = pneg %p572
      $region78: #{tpu_custom_call.1} parent=5 // pred_check_branch
        %575 = sbr.rel (%p573) target = $region80
      $region79: #{tpu_custom_call.1} parent=5 // pred_region
        %s576 = ssub.s32 %s25, 2
        // Predicated region
        $region81: #{tpu_custom_call.1} parent=79 // pred_check
          %p577 = pneg %p253
        $region82: #{tpu_custom_call.1} parent=79 // pred_check_branch
          %579 = sbr.rel (%p577) target = $region84
        $region83: #{tpu_custom_call.1} parent=79 // pred_region
          %s580 = sand.u32 %s238, 1
          %s581 = scalar_lea.sflag [#allocation6], %s580
          %s582 = sand.u32 %s238, 1
          %s583 = smul.addr %s582, 16
          %s584 = scalar_lea.vmem [#allocation12], %s583
          %586 = dma.done %s581, 256
        $region84: #{tpu_custom_call.1} parent=79 // pred_fallthru
          _
      $region80: #{tpu_custom_call.1} parent=5 // pred_fallthru
        _
    $region6: #{tpu_custom_call.1} parent=1 // loop_footer
      %s29 = sadd.s32 1, %s25
    $region7: #{tpu_custom_call.1} parent=1 // loop_footer_branch
      %24 = sbr.rel target = $region3
    $region8: #{tpu_custom_call.1} parent=1 // loop_exit
      _
    %587 = vsyncpa [#allocation5], 1
    %s588 = scalar_lea.sflag [#allocation5], 1
    %589 = vsyncpa %s588, 1
    %590 = vsyncpa [#allocation8], 1
    %591 = vsyncpa [#allocation11], 1
    %592 = vsyncpa [#allocation6], 1
    %s593 = scalar_lea.sflag [#allocation6], 1
    %594 = vsyncpa %s593, 1

</llo_original>
